<compile_context>
chip_gen: v5e
topology: v5e:2x2
jax: 0.10.0
libtpu: 0.0.40
codegen_flags: <defaults>
</compile_context>

<pallas_src>
import jax
import jax.numpy as jnp
from jax import lax
from jax.experimental import pallas as pl
from jax.experimental.pallas import tpu as pltpu


def _round_up(x, m):
    return (x + m - 1) // m * m


def _vmem_capacity_bytes():
    """Physical VMEM per TensorCore (128 MiB v5e/v6e, 64 MiB v7x); safe fallback."""
    try:
        cap = getattr(pltpu.get_tpu_info(), "vmem_capacity_bytes", None)
        if cap:
            return int(cap)
    except Exception:
        pass
    return 64 * 1024 * 1024  # conservative (v7x per-core figure)


def rnn_recurrence_kernel(lens_ref, xproj_ref, w_hh_ref, out_ref, h_scr):
    """Tanh-RNN recurrence over one (B-block, T-tile).

    lens_ref:  (Bb, 1)      int32         sequence lengths (packed-seq masking)
    xproj_ref: (Tt, Bb, Hp) matmul_dtype  tanh(emb) @ W_ih^T + (b_ih + b_hh)
    w_hh_ref:  (Hp, Hp)     matmul_dtype  recurrent weight, transposed, zero-padded
    out_ref:   (Tt, Bb, Hp) f32
    h_scr:     (Bb, Hp)     f32           hidden state carried across T-tiles
    """
    t_tile = pl.program_id(1)          # grid = (B-block [parallel], T-tile [arbitrary])
    Tt = xproj_ref.shape[0]

    @pl.when(t_tile == 0)
    def _():
        # PyTorch default h0 = 0 (per B-block / per core).
        h_scr[...] = jnp.zeros_like(h_scr)

    # Hoisted out of the (unrolled) time loop: JAX does not CSE broadcast_in_dim,
    # so build the (Bb, Hp) lens plane once per tile, not once per step.
    lens_full = jnp.broadcast_to(lens_ref[...], h_scr.shape)   # (Bb, Hp) int32
    w_hh = w_hh_ref[...]                                       # hoisted, reused
    op_dtype = w_hh_ref.dtype
    t0 = t_tile * Tt

    def step(i, h):
        # Single (Bb,Hp)x(Hp,Hp) MXU matmul on the serial chain; operands cast to
        # the matmul dtype ONLY at the dot input, accumulate + tanh stay f32.
        h_new = jnp.tanh(
            xproj_ref[i].astype(jnp.float32)
            + jnp.dot(h.astype(op_dtype), w_hh,
                      preferred_element_type=jnp.float32))
        # Packed-sequence zeroing past each row's length; lane-dense vreg store.
        out_ref[i] = jnp.where((t0 + i) < lens_full, h_new, 0.0)
        return h_new

    # h lives in vregs across the (unrolled) loop; scratch only at tile boundary.
    unroll = True if Tt <= 16 else 8
    h_scr[...] = lax.fori_loop(0, Tt, step, h_scr[...], unroll=unroll)


def text_processor_forward(q, q_lens, emb_table, w_ih, w_hh, b_ih, b_hh,
                           out_len=None, matmul_dtype=jnp.bfloat16):
    """q: (B, T) int32 token ids; q_lens: (B,) int32 (sorted descending, as
    pack_padded_sequence's enforce_sorted default requires).
    Returns (B, out_len or T, H) f32, zero past each sequence length."""
    B, T = q.shape
    H, E = w_ih.shape
    itemsize = jnp.dtype(matmul_dtype).itemsize

    # Padded shapes: lanes (last dim) multiple of 128; sublanes aligned to the
    # operand dtype's tile (8 rows f32, 16 rows bf16) so B-block offsets stay
    # tile-aligned.
    Hp = _round_up(H, 128)
    b_align = 8 if itemsize >= 4 else 16
    Bp0 = _round_up(B, 8)
    if Bp0 >= 2 * b_align:
        n_b = 2                                  # one B block per TensorCore (v7x)
        Bb = _round_up(pl.cdiv(Bp0, 2), b_align)
    else:
        n_b = 1
        Bb = Bp0
    Bp = n_b * Bb

    # ---- VMEM budget / T-tile selection (chip-aware) ------------------------
    # vmem_limit: ~48 MiB on v7x (64 MiB physical), ~96 MiB on v5e/v6e (128 MiB).
    vmem_limit = min((_vmem_capacity_bytes() * 3) // 4, 100 * 1024 * 1024)
    # Fixed residents: W_hh (counted double-buffered: conservative even though its
    # index_map is constant), h_scr, lens (x2 buffers, lane-padded).
    fixed = 2 * Hp * Hp * itemsize + Bb * Hp * 4 + 2 * Bb * 128 * 4
    stream_budget = int((vmem_limit - fixed) * 0.8)           # headroom for compiler
    per_step = Bb * Hp * (itemsize + 4)                       # xproj in + f32 out
    Tt = max(1, min(T, stream_budget // (2 * per_step)))      # x2 double-buffered
    n_tiles = pl.cdiv(T, Tt)
    Tpad = n_tiles * Tt

    # ---- Wrapper glue: the only large HBM intermediate is (Tpad, Bp, Hp) xproj ----
    # Pad the *small* operands up-front (q tokens, W_ih rows, bias, W_hh) and emit
    # xproj time-major directly — no jnp.pad / jnp.transpose pass over the big tensor.
    q_p = jnp.zeros((Bp, Tpad), q.dtype).at[:B, :T].set(q)
    q_tm = q_p.T                                              # (Tpad, Bp), cheap
    x = jnp.tanh(jnp.take(emb_table, q_tm, axis=0).astype(jnp.float32))  # (Tpad,Bp,E)

    w_ih_p = jnp.zeros((Hp, E), jnp.float32).at[:H, :].set(w_ih.astype(jnp.float32))
    bias_p = jnp.zeros((Hp,), jnp.float32).at[:H].set(
        (b_ih + b_hh).astype(jnp.float32))
    xproj = (jnp.einsum("tbe,he->tbh",
                        x.astype(matmul_dtype), w_ih_p.astype(matmul_dtype),
                        preferred_element_type=jnp.float32)
             + bias_p).astype(matmul_dtype)                   # (Tpad, Bp, Hp)
    # TODO(synk): the input projection could be fused into the kernel (one batched
    # (Tt*Bb,E)x(E,Hp) matmul per tile in the otherwise idle MXU slots), removing
    # the xproj HBM round-trip entirely; kept separate here for simplicity.

    w_hh_p = jnp.zeros((Hp, Hp), jnp.float32).at[:H, :H].set(
        w_hh.T.astype(jnp.float32)).astype(matmul_dtype)
    lens_p = jnp.zeros((Bp, 1), jnp.int32).at[:B, 0].set(q_lens.astype(jnp.int32))

    out_padded = pl.pallas_call(
        rnn_recurrence_kernel,
        out_shape=jax.ShapeDtypeStruct((Tpad, Bp, Hp), jnp.float32),
        grid_spec=pltpu.PrefetchScalarGridSpec(
            num_scalar_prefetch=0,
            grid=(n_b, n_tiles),
            in_specs=[
                pl.BlockSpec((Bb, 1), lambda b, t: (b, 0)),
                pl.BlockSpec((Tt, Bb, Hp), lambda b, t: (t, b, 0)),
                pl.BlockSpec((Hp, Hp), lambda b, t: (0, 0)),
            ],
            out_specs=pl.BlockSpec((Tt, Bb, Hp), lambda b, t: (t, b, 0)),
            scratch_shapes=[pltpu.VMEM((Bb, Hp), jnp.float32)],
        ),
        compiler_params=pltpu.CompilerParams(
            # B axis independent (megacore on v7x); T is the serial recurrence with
            # the hidden state carried in scratch across tiles.
            dimension_semantics=("parallel", "arbitrary"),
            vmem_limit_bytes=vmem_limit,
        ),
    )(lens_p, xproj, w_hh_p)

    out = jnp.transpose(out_padded[:T, :B, :H], (1, 0, 2))               # (B, T, H)
    if out_len is not None:
        # pad_packed_sequence(batch_first=True) trims to max(q_lens); out_len is a
        # STATIC Python int supplied by the caller (no device->host sync here).
        out = out[:, :out_len, :]
    return out
    # TODO(synk): final hidden state h_n is not exposed (the torch module discards
    # it); if it were, short sequences would need per-row freezing at t == len.


def reference_forward(q, q_lens, emb_table, w_ih, w_hh, b_ih, b_hh, out_len=None):
    """Pure-JAX f32 reference mirroring the torch module."""
    x = jnp.tanh(jnp.take(emb_table, q, axis=0).astype(jnp.float32))     # (B, T, E)
    B, T, _ = x.shape
    H = w_hh.shape[0]

    def cell(h, x_t):
        h_new = jnp.tanh(x_t @ w_ih.T + b_ih + h @ w_hh.T + b_hh)
        return h_new, h_new

    h0 = jnp.zeros((B, H), jnp.float32)
    _, outs = lax.scan(cell, h0, jnp.transpose(x, (1, 0, 2)))
    outs = jnp.transpose(outs, (1, 0, 2))                                # (B, T, H)
    mask = (jnp.arange(T)[None, :] < q_lens[:, None])[:, :, None]
    outs = jnp.where(mask, outs, 0.0)
    if out_len is not None:
        outs = outs[:, :out_len, :]
    return outs


if __name__ == "__main__":
    # small, module-consistent shapes
    embedding_tokens = 16     # vocab size
    embedding_features = 32   # E
    rnn_hidden_size = 32      # H
    B, T = 2, 8

    key = jax.random.PRNGKey(0)
    k_emb, k_wih, k_whh, k_bih, k_bhh, k_q = jax.random.split(key, 6)

    # deterministic parameter init (shapes from the module's __init__)
    # xavier_uniform-style embedding; PyTorch-RNN uniform(-1/sqrt(H), 1/sqrt(H))
    limit_emb = (6.0 / (embedding_tokens + embedding_features)) ** 0.5
    emb_table = jax.random.uniform(
        k_emb, (embedding_tokens, embedding_features),
        minval=-limit_emb, maxval=limit_emb, dtype=jnp.float32)
    s = 1.0 / (rnn_hidden_size ** 0.5)
    w_ih = jax.random.uniform(k_wih, (rnn_hidden_size, embedding_features),
                              minval=-s, maxval=s, dtype=jnp.float32)
    w_hh = jax.random.uniform(k_whh, (rnn_hidden_size, rnn_hidden_size),
                              minval=-s, maxval=s, dtype=jnp.float32)
    b_ih = jax.random.uniform(k_bih, (rnn_hidden_size,), minval=-s, maxval=s,
                              dtype=jnp.float32)
    b_hh = jax.random.uniform(k_bhh, (rnn_hidden_size,), minval=-s, maxval=s,
                              dtype=jnp.float32)

    # deterministic inputs: token ids (1..vocab-1; padding_idx=0 unused),
    # lengths sorted descending (pack_padded_sequence enforce_sorted default)
    q = jax.random.randint(k_q, (B, T), minval=1, maxval=embedding_tokens,
                           dtype=jnp.int32)
    q_lens = jnp.array([8, 5], dtype=jnp.int32)

    # static trim length computed on a concrete array, outside any jit
    t_out = int(q_lens.max())

    # Production path: bf16 MXU operands (f32 hidden state / accumulate / tanh).
    out_bf16 = text_processor_forward(q, q_lens, emb_table, w_ih, w_hh, b_ih, b_hh,
                                      out_len=t_out)
    out_bf16 = jax.block_until_ready(out_bf16)

    # Same kernel with f32 operands: tight check of the recurrence/masking logic.
    out_f32 = text_processor_forward(q, q_lens, emb_table, w_ih, w_hh, b_ih, b_hh,
                                     out_len=t_out, matmul_dtype=jnp.float32)
    out_f32 = jax.block_until_ready(out_f32)

    ref = reference_forward(q, q_lens, emb_table, w_ih, w_hh, b_ih, b_hh,
                            out_len=t_out)
    assert out_f32.shape == ref.shape, (out_f32.shape, ref.shape)
    assert out_bf16.shape == ref.shape, (out_bf16.shape, ref.shape)
    assert jnp.allclose(out_f32, ref, atol=1e-5, rtol=1e-5), "f32 mismatch vs ref"
    # bf16 dot operands: bounded approximation error vs the f32 reference.
    assert jnp.allclose(out_bf16, ref, atol=5e-2, rtol=5e-2), "bf16 mismatch vs ref"

    print("KERNEL_OK")
</pallas_src>

<mosaic_0001>
module attributes {stable_mosaic.version = 11 : i64} {
  func.func @rnn_recurrence_kernel(%arg0: i32, %arg1: i32, %arg2: memref<8x1xi32, #tpu.memory_space<vmem>>, %arg3: memref<8x8x128xbf16, #tpu.memory_space<vmem>>, %arg4: memref<128x128xbf16, #tpu.memory_space<vmem>>, %arg5: memref<8x8x128xf32, #tpu.memory_space<vmem>>, %arg6: memref<8x128xf32, #tpu.memory_space<vmem>>) attributes {dimension_semantics = [#tpu.dimension_semantics<parallel>, #tpu.dimension_semantics<arbitrary>], iteration_bounds = array<i64: 1, 1>, scalar_prefetch = 0 : i64, scratch_operands = 1 : i64, tpu.core_type = #tpu.core_type<tc>, window_params = [{transform_indices = @transform_0, window_bounds = array<i64: 8, 1>}, {transform_indices = @transform_1, window_bounds = array<i64: 8, 8, 128>}, {pipeline_mode = #tpu.pipeline_mode<synchronous>, transform_indices = @transform_2, window_bounds = array<i64: 128, 128>}, {transform_indices = @transform_3, window_bounds = array<i64: 8, 8, 128>}]} {
    %c0_i32 = arith.constant 0 : i32
    %0 = arith.cmpi eq, %arg1, %c0_i32 : i32
    %1 = arith.extui %0 : i1 to i32
    %c0_i32_0 = arith.constant 0 : i32
    %2 = arith.cmpi ne, %1, %c0_i32_0 : i32
    scf.if %2 {
      %cst_57 = arith.constant 0.000000e+00 : f32
      %146 = vector.broadcast %cst_57 : f32 to vector<8x128xf32>
      %c0_58 = arith.constant 0 : index
      %c0_59 = arith.constant 0 : index
      %147 = vector.load %arg6[%c0_58, %c0_59] : memref<8x128xf32, #tpu.memory_space<vmem>>, vector<8x128xf32>
      tpu.vector_store %arg6[%c0_58, %c0_59], %146 {strides = array<i32>} : memref<8x128xf32, #tpu.memory_space<vmem>>, vector<8x128xf32>,
    } else {
    }
    %c0 = arith.constant 0 : index
    %c0_1 = arith.constant 0 : index
    %3 = vector.load %arg2[%c0, %c0_1] : memref<8x1xi32, #tpu.memory_space<vmem>>, vector<8x1xi32>
    %4 = vector.shape_cast %3 : vector<8x1xi32> to vector<8x1xi32>
    %5 = vector.broadcast %4 : vector<8x1xi32> to vector<8x128xi32>
    %c0_2 = arith.constant 0 : index
    %c0_3 = arith.constant 0 : index
    %6 = vector.load %arg4[%c0_2, %c0_3] : memref<128x128xbf16, #tpu.memory_space<vmem>>, vector<128x128xbf16>
    %c8_i32 = arith.constant 8 : i32
    %7 = arith.muli %arg1, %c8_i32 : i32
    %c0_4 = arith.constant 0 : index
    %c0_5 = arith.constant 0 : index
    %8 = vector.load %arg6[%c0_4, %c0_5] : memref<8x128xf32, #tpu.memory_space<vmem>>, vector<8x128xf32>
    %c0_i32_6 = arith.constant 0 : i32
    %9 = arith.index_cast %c0_i32_6 : i32 to index
    %c0_7 = arith.constant 0 : index
    %c0_8 = arith.constant 0 : index
    %10 = vector.load %arg3[%9, %c0_7, %c0_8] : memref<8x8x128xbf16, #tpu.memory_space<vmem>>, vector<1x8x128xbf16>
    %11 = vector.shape_cast %10 : vector<1x8x128xbf16> to vector<8x128xbf16>
    %12 = arith.extf %11 : vector<8x128xbf16> to vector<8x128xf32>
    %13 = arith.truncf %8 : vector<8x128xf32> to vector<8x128xbf16>
    %cst = arith.constant dense<0.000000e+00> : vector<8x128xf32>
    %14 = tpu.matmul %13, %6, %cst {dimension_numbers = #tpu.dot_dimension_numbers<[1], [0], [0], [1], [0, 0, 1, 1], [], []>} : vector<8x128xbf16>, vector<128x128xbf16>, vector<8x128xf32> -> vector<8x128xf32>
    %15 = arith.addf %12, %14 : vector<8x128xf32>
    %16 = math.tanh %15 : vector<8x128xf32>
    %17 = arith.addi %7, %c0_i32_6 : i32
    %18 = vector.broadcast %17 : i32 to vector<8x128xi32>
    %19 = arith.cmpi slt, %18, %5 : vector<8x128xi32>
    %cst_9 = arith.constant 0.000000e+00 : f32
    %20 = vector.broadcast %cst_9 : f32 to vector<8x128xf32>
    %21 = arith.select %19, %16, %20 : vector<8x128xi1>, vector<8x128xf32>
    %22 = arith.index_cast %c0_i32_6 : i32 to index
    %c0_10 = arith.constant 0 : index
    %c0_11 = arith.constant 0 : index
    %23 = vector.load %arg5[%22, %c0_10, %c0_11] : memref<8x8x128xf32, #tpu.memory_space<vmem>>, vector<1x8x128xf32>
    %24 = vector.shape_cast %23 : vector<1x8x128xf32> to vector<8x128xf32>
    %25 = vector.shape_cast %21 : vector<8x128xf32> to vector<1x8x128xf32>
    tpu.vector_store %arg5[%22, %c0_10, %c0_11], %25 {strides = array<i32>} : memref<8x8x128xf32, #tpu.memory_space<vmem>>, vector<1x8x128xf32>,
    %c1_i32 = arith.constant 1 : i32
    %26 = arith.index_cast %c1_i32 : i32 to index
    %c0_12 = arith.constant 0 : index
    %c0_13 = arith.constant 0 : index
    %27 = vector.load %arg3[%26, %c0_12, %c0_13] : memref<8x8x128xbf16, #tpu.memory_space<vmem>>, vector<1x8x128xbf16>
    %28 = vector.shape_cast %27 : vector<1x8x128xbf16> to vector<8x128xbf16>
    %29 = arith.extf %28 : vector<8x128xbf16> to vector<8x128xf32>
    %30 = arith.truncf %16 : vector<8x128xf32> to vector<8x128xbf16>
    %cst_14 = arith.constant dense<0.000000e+00> : vector<8x128xf32>
    %31 = tpu.matmul %30, %6, %cst_14 {dimension_numbers = #tpu.dot_dimension_numbers<[1], [0], [0], [1], [0, 0, 1, 1], [], []>} : vector<8x128xbf16>, vector<128x128xbf16>, vector<8x128xf32> -> vector<8x128xf32>
    %32 = arith.addf %29, %31 : vector<8x128xf32>
    %33 = math.tanh %32 : vector<8x128xf32>
    %34 = arith.addi %7, %c1_i32 : i32
    %35 = vector.broadcast %34 : i32 to vector<8x128xi32>
    %36 = arith.cmpi slt, %35, %5 : vector<8x128xi32>
    %cst_15 = arith.constant 0.000000e+00 : f32
    %37 = vector.broadcast %cst_15 : f32 to vector<8x128xf32>
    %38 = arith.select %36, %33, %37 : vector<8x128xi1>, vector<8x128xf32>
    %39 = arith.index_cast %c1_i32 : i32 to index
    %c0_16 = arith.constant 0 : index
    %c0_17 = arith.constant 0 : index
    %40 = vector.load %arg5[%39, %c0_16, %c0_17] : memref<8x8x128xf32, #tpu.memory_space<vmem>>, vector<1x8x128xf32>
    %41 = vector.shape_cast %40 : vector<1x8x128xf32> to vector<8x128xf32>
    %42 = vector.shape_cast %38 : vector<8x128xf32> to vector<1x8x128xf32>
    tpu.vector_store %arg5[%39, %c0_16, %c0_17], %42 {strides = array<i32>} : memref<8x8x128xf32, #tpu.memory_space<vmem>>, vector<1x8x128xf32>,
    %c2_i32 = arith.constant 2 : i32
    %43 = arith.index_cast %c2_i32 : i32 to index
    %c0_18 = arith.constant 0 : index
    %c0_19 = arith.constant 0 : index
    %44 = vector.load %arg3[%43, %c0_18, %c0_19] : memref<8x8x128xbf16, #tpu.memory_space<vmem>>, vector<1x8x128xbf16>
    %45 = vector.shape_cast %44 : vector<1x8x128xbf16> to vector<8x128xbf16>
    %46 = arith.extf %45 : vector<8x128xbf16> to vector<8x128xf32>
    %47 = arith.truncf %33 : vector<8x128xf32> to vector<8x128xbf16>
    %cst_20 = arith.constant dense<0.000000e+00> : vector<8x128xf32>
    %48 = tpu.matmul %47, %6, %cst_20 {dimension_numbers = #tpu.dot_dimension_numbers<[1], [0], [0], [1], [0, 0, 1, 1], [], []>} : vector<8x128xbf16>, vector<128x128xbf16>, vector<8x128xf32> -> vector<8x128xf32>
    %49 = arith.addf %46, %48 : vector<8x128xf32>
    %50 = math.tanh %49 : vector<8x128xf32>
    %51 = arith.addi %7, %c2_i32 : i32
    %52 = vector.broadcast %51 : i32 to vector<8x128xi32>
    %53 = arith.cmpi slt, %52, %5 : vector<8x128xi32>
    %cst_21 = arith.constant 0.000000e+00 : f32
    %54 = vector.broadcast %cst_21 : f32 to vector<8x128xf32>
    %55 = arith.select %53, %50, %54 : vector<8x128xi1>, vector<8x128xf32>
    %56 = arith.index_cast %c2_i32 : i32 to index
    %c0_22 = arith.constant 0 : index
    %c0_23 = arith.constant 0 : index
    %57 = vector.load %arg5[%56, %c0_22, %c0_23] : memref<8x8x128xf32, #tpu.memory_space<vmem>>, vector<1x8x128xf32>
    %58 = vector.shape_cast %57 : vector<1x8x128xf32> to vector<8x128xf32>
    %59 = vector.shape_cast %55 : vector<8x128xf32> to vector<1x8x128xf32>
    tpu.vector_store %arg5[%56, %c0_22, %c0_23], %59 {strides = array<i32>} : memref<8x8x128xf32, #tpu.memory_space<vmem>>, vector<1x8x128xf32>,
    %c3_i32 = arith.constant 3 : i32
    %60 = arith.index_cast %c3_i32 : i32 to index
    %c0_24 = arith.constant 0 : index
    %c0_25 = arith.constant 0 : index
    %61 = vector.load %arg3[%60, %c0_24, %c0_25] : memref<8x8x128xbf16, #tpu.memory_space<vmem>>, vector<1x8x128xbf16>
    %62 = vector.shape_cast %61 : vector<1x8x128xbf16> to vector<8x128xbf16>
    %63 = arith.extf %62 : vector<8x128xbf16> to vector<8x128xf32>
    %64 = arith.truncf %50 : vector<8x128xf32> to vector<8x128xbf16>
    %cst_26 = arith.constant dense<0.000000e+00> : vector<8x128xf32>
    %65 = tpu.matmul %64, %6, %cst_26 {dimension_numbers = #tpu.dot_dimension_numbers<[1], [0], [0], [1], [0, 0, 1, 1], [], []>} : vector<8x128xbf16>, vector<128x128xbf16>, vector<8x128xf32> -> vector<8x128xf32>
    %66 = arith.addf %63, %65 : vector<8x128xf32>
    %67 = math.tanh %66 : vector<8x128xf32>
    %68 = arith.addi %7, %c3_i32 : i32
    %69 = vector.broadcast %68 : i32 to vector<8x128xi32>
    %70 = arith.cmpi slt, %69, %5 : vector<8x128xi32>
    %cst_27 = arith.constant 0.000000e+00 : f32
    %71 = vector.broadcast %cst_27 : f32 to vector<8x128xf32>
    %72 = arith.select %70, %67, %71 : vector<8x128xi1>, vector<8x128xf32>
    %73 = arith.index_cast %c3_i32 : i32 to index
    %c0_28 = arith.constant 0 : index
    %c0_29 = arith.constant 0 : index
    %74 = vector.load %arg5[%73, %c0_28, %c0_29] : memref<8x8x128xf32, #tpu.memory_space<vmem>>, vector<1x8x128xf32>
    %75 = vector.shape_cast %74 : vector<1x8x128xf32> to vector<8x128xf32>
    %76 = vector.shape_cast %72 : vector<8x128xf32> to vector<1x8x128xf32>
    tpu.vector_store %arg5[%73, %c0_28, %c0_29], %76 {strides = array<i32>} : memref<8x8x128xf32, #tpu.memory_space<vmem>>, vector<1x8x128xf32>,
    %c4_i32 = arith.constant 4 : i32
    %77 = arith.index_cast %c4_i32 : i32 to index
    %c0_30 = arith.constant 0 : index
    %c0_31 = arith.constant 0 : index
    %78 = vector.load %arg3[%77, %c0_30, %c0_31] : memref<8x8x128xbf16, #tpu.memory_space<vmem>>, vector<1x8x128xbf16>
    %79 = vector.shape_cast %78 : vector<1x8x128xbf16> to vector<8x128xbf16>
    %80 = arith.extf %79 : vector<8x128xbf16> to vector<8x128xf32>
    %81 = arith.truncf %67 : vector<8x128xf32> to vector<8x128xbf16>
    %cst_32 = arith.constant dense<0.000000e+00> : vector<8x128xf32>
    %82 = tpu.matmul %81, %6, %cst_32 {dimension_numbers = #tpu.dot_dimension_numbers<[1], [0], [0], [1], [0, 0, 1, 1], [], []>} : vector<8x128xbf16>, vector<128x128xbf16>, vector<8x128xf32> -> vector<8x128xf32>
    %83 = arith.addf %80, %82 : vector<8x128xf32>
    %84 = math.tanh %83 : vector<8x128xf32>
    %85 = arith.addi %7, %c4_i32 : i32
    %86 = vector.broadcast %85 : i32 to vector<8x128xi32>
    %87 = arith.cmpi slt, %86, %5 : vector<8x128xi32>
    %cst_33 = arith.constant 0.000000e+00 : f32
    %88 = vector.broadcast %cst_33 : f32 to vector<8x128xf32>
    %89 = arith.select %87, %84, %88 : vector<8x128xi1>, vector<8x128xf32>
    %90 = arith.index_cast %c4_i32 : i32 to index
    %c0_34 = arith.constant 0 : index
    %c0_35 = arith.constant 0 : index
    %91 = vector.load %arg5[%90, %c0_34, %c0_35] : memref<8x8x128xf32, #tpu.memory_space<vmem>>, vector<1x8x128xf32>
    %92 = vector.shape_cast %91 : vector<1x8x128xf32> to vector<8x128xf32>
    %93 = vector.shape_cast %89 : vector<8x128xf32> to vector<1x8x128xf32>
    tpu.vector_store %arg5[%90, %c0_34, %c0_35], %93 {strides = array<i32>} : memref<8x8x128xf32, #tpu.memory_space<vmem>>, vector<1x8x128xf32>,
    %c5_i32 = arith.constant 5 : i32
    %94 = arith.index_cast %c5_i32 : i32 to index
    %c0_36 = arith.constant 0 : index
    %c0_37 = arith.constant 0 : index
    %95 = vector.load %arg3[%94, %c0_36, %c0_37] : memref<8x8x128xbf16, #tpu.memory_space<vmem>>, vector<1x8x128xbf16>
    %96 = vector.shape_cast %95 : vector<1x8x128xbf16> to vector<8x128xbf16>
    %97 = arith.extf %96 : vector<8x128xbf16> to vector<8x128xf32>
    %98 = arith.truncf %84 : vector<8x128xf32> to vector<8x128xbf16>
    %cst_38 = arith.constant dense<0.000000e+00> : vector<8x128xf32>
    %99 = tpu.matmul %98, %6, %cst_38 {dimension_numbers = #tpu.dot_dimension_numbers<[1], [0], [0], [1], [0, 0, 1, 1], [], []>} : vector<8x128xbf16>, vector<128x128xbf16>, vector<8x128xf32> -> vector<8x128xf32>
    %100 = arith.addf %97, %99 : vector<8x128xf32>
    %101 = math.tanh %100 : vector<8x128xf32>
    %102 = arith.addi %7, %c5_i32 : i32
    %103 = vector.broadcast %102 : i32 to vector<8x128xi32>
    %104 = arith.cmpi slt, %103, %5 : vector<8x128xi32>
    %cst_39 = arith.constant 0.000000e+00 : f32
    %105 = vector.broadcast %cst_39 : f32 to vector<8x128xf32>
    %106 = arith.select %104, %101, %105 : vector<8x128xi1>, vector<8x128xf32>
    %107 = arith.index_cast %c5_i32 : i32 to index
    %c0_40 = arith.constant 0 : index
    %c0_41 = arith.constant 0 : index
    %108 = vector.load %arg5[%107, %c0_40, %c0_41] : memref<8x8x128xf32, #tpu.memory_space<vmem>>, vector<1x8x128xf32>
    %109 = vector.shape_cast %108 : vector<1x8x128xf32> to vector<8x128xf32>
    %110 = vector.shape_cast %106 : vector<8x128xf32> to vector<1x8x128xf32>
    tpu.vector_store %arg5[%107, %c0_40, %c0_41], %110 {strides = array<i32>} : memref<8x8x128xf32, #tpu.memory_space<vmem>>, vector<1x8x128xf32>,
    %c6_i32 = arith.constant 6 : i32
    %111 = arith.index_cast %c6_i32 : i32 to index
    %c0_42 = arith.constant 0 : index
    %c0_43 = arith.constant 0 : index
    %112 = vector.load %arg3[%111, %c0_42, %c0_43] : memref<8x8x128xbf16, #tpu.memory_space<vmem>>, vector<1x8x128xbf16>
    %113 = vector.shape_cast %112 : vector<1x8x128xbf16> to vector<8x128xbf16>
    %114 = arith.extf %113 : vector<8x128xbf16> to vector<8x128xf32>
    %115 = arith.truncf %101 : vector<8x128xf32> to vector<8x128xbf16>
    %cst_44 = arith.constant dense<0.000000e+00> : vector<8x128xf32>
    %116 = tpu.matmul %115, %6, %cst_44 {dimension_numbers = #tpu.dot_dimension_numbers<[1], [0], [0], [1], [0, 0, 1, 1], [], []>} : vector<8x128xbf16>, vector<128x128xbf16>, vector<8x128xf32> -> vector<8x128xf32>
    %117 = arith.addf %114, %116 : vector<8x128xf32>
    %118 = math.tanh %117 : vector<8x128xf32>
    %119 = arith.addi %7, %c6_i32 : i32
    %120 = vector.broadcast %119 : i32 to vector<8x128xi32>
    %121 = arith.cmpi slt, %120, %5 : vector<8x128xi32>
    %cst_45 = arith.constant 0.000000e+00 : f32
    %122 = vector.broadcast %cst_45 : f32 to vector<8x128xf32>
    %123 = arith.select %121, %118, %122 : vector<8x128xi1>, vector<8x128xf32>
    %124 = arith.index_cast %c6_i32 : i32 to index
    %c0_46 = arith.constant 0 : index
    %c0_47 = arith.constant 0 : index
    %125 = vector.load %arg5[%124, %c0_46, %c0_47] : memref<8x8x128xf32, #tpu.memory_space<vmem>>, vector<1x8x128xf32>
    %126 = vector.shape_cast %125 : vector<1x8x128xf32> to vector<8x128xf32>
    %127 = vector.shape_cast %123 : vector<8x128xf32> to vector<1x8x128xf32>
    tpu.vector_store %arg5[%124, %c0_46, %c0_47], %127 {strides = array<i32>} : memref<8x8x128xf32, #tpu.memory_space<vmem>>, vector<1x8x128xf32>,
    %c7_i32 = arith.constant 7 : i32
    %128 = arith.index_cast %c7_i32 : i32 to index
    %c0_48 = arith.constant 0 : index
    %c0_49 = arith.constant 0 : index
    %129 = vector.load %arg3[%128, %c0_48, %c0_49] : memref<8x8x128xbf16, #tpu.memory_space<vmem>>, vector<1x8x128xbf16>
    %130 = vector.shape_cast %129 : vector<1x8x128xbf16> to vector<8x128xbf16>
    %131 = arith.extf %130 : vector<8x128xbf16> to vector<8x128xf32>
    %132 = arith.truncf %118 : vector<8x128xf32> to vector<8x128xbf16>
    %cst_50 = arith.constant dense<0.000000e+00> : vector<8x128xf32>
    %133 = tpu.matmul %132, %6, %cst_50 {dimension_numbers = #tpu.dot_dimension_numbers<[1], [0], [0], [1], [0, 0, 1, 1], [], []>} : vector<8x128xbf16>, vector<128x128xbf16>, vector<8x128xf32> -> vector<8x128xf32>
    %134 = arith.addf %131, %133 : vector<8x128xf32>
    %135 = math.tanh %134 : vector<8x128xf32>
    %136 = arith.addi %7, %c7_i32 : i32
    %137 = vector.broadcast %136 : i32 to vector<8x128xi32>
    %138 = arith.cmpi slt, %137, %5 : vector<8x128xi32>
    %cst_51 = arith.constant 0.000000e+00 : f32
    %139 = vector.broadcast %cst_51 : f32 to vector<8x128xf32>
    %140 = arith.select %138, %135, %139 : vector<8x128xi1>, vector<8x128xf32>
    %141 = arith.index_cast %c7_i32 : i32 to index
    %c0_52 = arith.constant 0 : index
    %c0_53 = arith.constant 0 : index
    %142 = vector.load %arg5[%141, %c0_52, %c0_53] : memref<8x8x128xf32, #tpu.memory_space<vmem>>, vector<1x8x128xf32>
    %143 = vector.shape_cast %142 : vector<1x8x128xf32> to vector<8x128xf32>
    %144 = vector.shape_cast %140 : vector<8x128xf32> to vector<1x8x128xf32>
    tpu.vector_store %arg5[%141, %c0_52, %c0_53], %144 {strides = array<i32>} : memref<8x8x128xf32, #tpu.memory_space<vmem>>, vector<1x8x128xf32>,
    %c8_i32_54 = arith.constant 8 : i32
    %c0_55 = arith.constant 0 : index
    %c0_56 = arith.constant 0 : index
    %145 = vector.load %arg6[%c0_55, %c0_56] : memref<8x128xf32, #tpu.memory_space<vmem>>, vector<8x128xf32>
    tpu.vector_store %arg6[%c0_55, %c0_56], %135 {strides = array<i32>} : memref<8x128xf32, #tpu.memory_space<vmem>>, vector<8x128xf32>,
    return
  }
  func.func @transform_0(%arg0: i32, %arg1: i32) -> (i32, i32) {
    %c0_i32 = arith.constant 0 : i32
    %c0_i32_0 = arith.constant 0 : i32
    return %arg0, %c0_i32 : i32, i32
  }
  func.func @transform_1(%arg0: i32, %arg1: i32) -> (i32, i32, i32) {
    %c0_i32 = arith.constant 0 : i32
    %c0_i32_0 = arith.constant 0 : i32
    return %arg1, %arg0, %c0_i32 : i32, i32, i32
  }
  func.func @transform_2(%arg0: i32, %arg1: i32) -> (i32, i32) {
    %c0_i32 = arith.constant 0 : i32
    %c0_i32_0 = arith.constant 0 : i32
    %c0_i32_1 = arith.constant 0 : i32
    return %c0_i32, %c0_i32_0 : i32, i32
  }
  func.func @transform_3(%arg0: i32, %arg1: i32) -> (i32, i32, i32) {
    %c0_i32 = arith.constant 0 : i32
    %c0_i32_0 = arith.constant 0 : i32
    return %arg1, %arg0, %c0_i32 : i32, i32, i32
  }
}

</mosaic_0001>

<llo_original>
// kernel: tpu_custom_call.1
$region0: #{tpu_custom_call.1}
  #allocation0 [shape = 'u32[]', space=smem, size = 0x4, offset = 0x4, fixed_abs, tag = 'smem constant byte address 0x4 - core index']
  #allocation1 [shape = 'u32[72,128]{1,0:T(1,128)}', space=vmem, size = 0x9000, scoped, tag = 'internal scratch']
  #allocation2 [shape = 'f32[8,128]{1,0:T(8,128)}', space=vmem, size = 0x1000, scoped, tag = 'scratch operand']
  %s0 = inlined_call_operand.vmem [shape: s32[8,1], index: 0, kind: input, shape index: {}]
  %s1 = inlined_call_operand.hbm [shape: bf16[8,8,128], index: 1, kind: input, shape index: {}]
  %s2 = inlined_call_operand.hbm [shape: bf16[128,128], index: 2, kind: input, shape index: {}]
  %s3 = inlined_call_operand.hbm [shape: f32[8,8,128], index: 3, kind: output, shape index: {}]
  %s4 = sld [smem:[#allocation0]]
  $region34: #{tpu_custom_call.1} parent=0
    _
  %s6 = ssub.s32 1, %s4
  %s7 = scalar_select 0, %s6, %s4
  $region1: #{tpu_custom_call.1} parent=0
    #allocation3 [shape = 'u8[16384]{0}', space=vmem, size = 0x4000, scoped, tag = 'input window, operand 1, single buffered']
    #allocation4 [shape = 's32[1]{0}', space=sflag, size = 0x4, scoped, tag = 'scoped memory for tpu_custom_call.1']
    #allocation5 [shape = 's32[1]{0}', space=sflag, size = 0x4, scoped, tag = 'scoped memory for tpu_custom_call.1']
    #allocation6 [shape = 'u8[32768]{0}', space=vmem, size = 0x8000, scoped, tag = 'input window, operand 2, single buffered']
    #allocation7 [shape = 's32[1]{0}', space=sflag, size = 0x4, scoped, tag = 'scoped memory for tpu_custom_call.1']
    #allocation8 [shape = 'u8[32768]{0}', space=vmem, size = 0x8000, scoped, tag = 'output window, operand 0, single buffered']
    %8 = vsyncpa [#allocation4], 0
    %9 = vsyncpa [#allocation7], 0
    %10 = vsyncpa [#allocation5], 0
    // Predicated region
    $region2: #{tpu_custom_call.1} parent=1 // pred_check
      _
    $region3: #{tpu_custom_call.1} parent=1 // pred_check_branch
      %12 = sbr.rel (0) target = $region5
    $region4: #{tpu_custom_call.1} parent=1 // pred_region
      _
    $region5: #{tpu_custom_call.1} parent=1 // pred_fallthru
      _
    // Predicated region
    $region6: #{tpu_custom_call.1} parent=1 // pred_check
      _
    $region7: #{tpu_custom_call.1} parent=1 // pred_check_branch
      %14 = sbr.rel (0) target = $region9
    $region8: #{tpu_custom_call.1} parent=1 // pred_region
      %16 = vsyncadd [#allocation4], 0
      %s17 = sshll.u32 %s1, 4
      %s18 = int_to_ptr.hbm [resolvable:$true] %s17
      %s19 = sshll.u32 [#allocation3], 4
      %s20 = int_to_ptr.vmem [resolvable:$true] %s19
      %25 = dma.hbm_to_vmem [thread:$0]  %s18, 512, %s20, [#allocation4], 64, 64, 4
    $region9: #{tpu_custom_call.1} parent=1 // pred_fallthru
      _
    // Predicated region
    $region10: #{tpu_custom_call.1} parent=1 // pred_check
      _
    $region11: #{tpu_custom_call.1} parent=1 // pred_check_branch
      %27 = sbr.rel (0) target = $region13
    $region12: #{tpu_custom_call.1} parent=1 // pred_region
      %29 = vsyncadd [#allocation7], 0
      %s30 = sshll.u32 %s2, 4
      %s31 = int_to_ptr.hbm [resolvable:$true] %s30
      %s32 = sshll.u32 [#allocation6], 4
      %s33 = int_to_ptr.vmem [resolvable:$true] %s32
      %38 = dma.hbm_to_vmem [thread:$0]  %s31, 1024, %s33, [#allocation7], 64, 64, 4
    $region13: #{tpu_custom_call.1} parent=1 // pred_fallthru
      _
    // Predicated region
    $region14: #{tpu_custom_call.1} parent=1 // pred_check
      _
    $region15: #{tpu_custom_call.1} parent=1 // pred_check_branch
      %40 = sbr.rel (0) target = $region17
    $region16: #{tpu_custom_call.1} parent=1 // pred_region
      %42 = dma.done [#allocation4], 512
    $region17: #{tpu_custom_call.1} parent=1 // pred_fallthru
      _
    // Predicated region
    $region18: #{tpu_custom_call.1} parent=1 // pred_check
      _
    $region19: #{tpu_custom_call.1} parent=1 // pred_check_branch
      %44 = sbr.rel (0) target = $region21
    $region20: #{tpu_custom_call.1} parent=1 // pred_region
      %46 = dma.done [#allocation7], 1024
    $region21: #{tpu_custom_call.1} parent=1 // pred_fallthru
      _
    %p47 = scmp.eq.s32.totalorder 0, 0
    // Predicated region
    $region22: #{tpu_custom_call.1} parent=1 // pred_check
      %p48 = pneg %p47
    $region23: #{tpu_custom_call.1} parent=1 // pred_check_branch
      %50 = sbr.rel (%p48) target = $region25
    $region24: #{tpu_custom_call.1} parent=1 // pred_region
      %51 = vst [vmem:[#allocation2] sm:$0xff] 0.0
    $region25: #{tpu_custom_call.1} parent=1 // pred_fallthru
      _
    %v52 = vld [vmem:[%s0] sm:$0xff]
    %53 = vset.pattern.permute.xlu0 0
    %54 = vperm.xlu0 %53, %v52
    %v55 = vpop.permute.xlu0 %54
    %v56 = vld [vmem:[#allocation6] sm:$0xf]
    %v57 = vld [vmem:[#allocation6 + $0x4] sm:$0xf]
    %v58 = vld [vmem:[#allocation6 + $0x8] sm:$0xf]
    %v59 = vld [vmem:[#allocation6 + $0xc] sm:$0xf]
    %v60 = vld [vmem:[#allocation6 + $0x10] sm:$0xf]
    %v61 = vld [vmem:[#allocation6 + $0x14] sm:$0xf]
    %v62 = vld [vmem:[#allocation6 + $0x18] sm:$0xf]
    %v63 = vld [vmem:[#allocation6 + $0x1c] sm:$0xf]
    %v64 = vld [vmem:[#allocation6 + $0x20] sm:$0xf]
    %v65 = vld [vmem:[#allocation6 + $0x24] sm:$0xf]
    %v66 = vld [vmem:[#allocation6 + $0x28] sm:$0xf]
    %v67 = vld [vmem:[#allocation6 + $0x2c] sm:$0xf]
    %v68 = vld [vmem:[#allocation6 + $0x30] sm:$0xf]
    %v69 = vld [vmem:[#allocation6 + $0x34] sm:$0xf]
    %v70 = vld [vmem:[#allocation6 + $0x38] sm:$0xf]
    %v71 = vld [vmem:[#allocation6 + $0x3c] sm:$0xf]
    %s72 = smul.u32 0, 8
    %v73 = vld [vmem:[#allocation2] sm:$0xff]
    %v74 = vld [vmem:[#allocation3] sm:$0xf]
    %v75 = vunpack.c.l.bf16 %v74
    %v76 = vpack.c.bf16 %v73, %v73
    %v93 = vunpack.c.l.b16 %v56
    %v94 = vunpack.c.l.b16 %v57
    %v95 = vunpack.c.l.b16 %v58
    %v96 = vunpack.c.l.b16 %v59
    %v97 = vunpack.c.l.b16 %v60
    %v98 = vunpack.c.l.b16 %v61
    %v99 = vunpack.c.l.b16 %v62
    %v100 = vunpack.c.l.b16 %v63
    %v101 = vunpack.c.l.b16 %v64
    %v102 = vunpack.c.l.b16 %v65
    %v103 = vunpack.c.l.b16 %v66
    %v104 = vunpack.c.l.b16 %v67
    %v105 = vunpack.c.l.b16 %v68
    %v106 = vunpack.c.l.b16 %v69
    %v107 = vunpack.c.l.b16 %v70
    %v108 = vunpack.c.l.b16 %v71
    %v109 = vpack.c.b16 %v94, %v93
    %v110 = vpack.c.b16 %v96, %v95
    %v111 = vpack.c.b16 %v98, %v97
    %v112 = vpack.c.b16 %v100, %v99
    %v113 = vpack.c.b16 %v102, %v101
    %v114 = vpack.c.b16 %v104, %v103
    %v115 = vpack.c.b16 %v106, %v105
    %v116 = vpack.c.b16 %v108, %v107
    %125 = vmatpush.bf16.msra.mxu0 %v116
    %126 = vmatpush.bf16.msra.mxu0 %v115
    %127 = vmatpush.bf16.msra.mxu0 %v114
    %128 = vmatpush.bf16.msra.mxu0 %v113
    %129 = vmatpush.bf16.msra.mxu0 %v112
    %130 = vmatpush.bf16.msra.mxu0 %v111
    %131 = vmatpush.bf16.msra.mxu0 %v110
    %132 = vmatpush.bf16.msra.mxu0 %v109
    %133 = vmatmul.bf16.gmra.mxu0 %v76
    %v134 = vpop.f32.mrf.mxu0
    %v135 = vadd.f32 0.0, %v134
    %v136 = vpop.f32.mrf.mxu0
    %137 = vdwg.mxu0
    %v138 = vadd.f32 %v75, %v135
    %v139 = vtanh.pop %v138
    %v140 = vstv %s72
    %vm141 = vcmp.lt.s32.totalorder %v140, %v55
    %v142 = vsel %vm141, %v139, 0.0
    %143 = vst [vmem:[#allocation8] sm:$0xff] %v142
    %s144 = scalar_lea.vmem [#allocation3], 4
    %v145 = vld [vmem:[%s144] sm:$0xf]
    %v146 = vunpack.c.l.bf16 %v145
    %v147 = vpack.c.bf16 %v139, %v139
    %148 = vmatpush.bf16.msra.mxu0 %v116
    %149 = vmatpush.bf16.msra.mxu0 %v115
    %150 = vmatpush.bf16.msra.mxu0 %v114
    %151 = vmatpush.bf16.msra.mxu0 %v113
    %152 = vmatpush.bf16.msra.mxu0 %v112
    %153 = vmatpush.bf16.msra.mxu0 %v111
    %154 = vmatpush.bf16.msra.mxu0 %v110
    %155 = vmatpush.bf16.msra.mxu0 %v109
    %156 = vmatmul.bf16.gmra.mxu0 %v147
    %v157 = vpop.f32.mrf.mxu0
    %v158 = vadd.f32 0.0, %v157
    %v159 = vpop.f32.mrf.mxu0
    %160 = vdwg.mxu0
    %v161 = vadd.f32 %v146, %v158
    %v162 = vtanh.pop %v161
    %s163 = sadd.s32 %s72, 1
    %v164 = vstv %s163
    %vm165 = vcmp.lt.s32.totalorder %v164, %v55
    %v166 = vsel %vm165, %v162, 0.0
    %s167 = scalar_lea.vmem [#allocation8], 8
    %168 = vst [vmem:[%s167] sm:$0xff] %v166
    %s169 = scalar_lea.vmem [#allocation3], 8
    %v170 = vld [vmem:[%s169] sm:$0xf]
    %v171 = vunpack.c.l.bf16 %v170
    %v172 = vpack.c.bf16 %v162, %v162
    %173 = vmatpush.bf16.msra.mxu0 %v116
    %174 = vmatpush.bf16.msra.mxu0 %v115
    %175 = vmatpush.bf16.msra.mxu0 %v114
    %176 = vmatpush.bf16.msra.mxu0 %v113
    %177 = vmatpush.bf16.msra.mxu0 %v112
    %178 = vmatpush.bf16.msra.mxu0 %v111
    %179 = vmatpush.bf16.msra.mxu0 %v110
    %180 = vmatpush.bf16.msra.mxu0 %v109
    %181 = vmatmul.bf16.gmra.mxu0 %v172
    %v182 = vpop.f32.mrf.mxu0
    %v183 = vadd.f32 0.0, %v182
    %v184 = vpop.f32.mrf.mxu0
    %185 = vdwg.mxu0
    %v186 = vadd.f32 %v171, %v183
    %v187 = vtanh.pop %v186
    %s188 = sadd.s32 %s72, 2
    %v189 = vstv %s188
    %vm190 = vcmp.lt.s32.totalorder %v189, %v55
    %v191 = vsel %vm190, %v187, 0.0
    %s192 = scalar_lea.vmem [#allocation8], 16
    %193 = vst [vmem:[%s192] sm:$0xff] %v191
    %s194 = scalar_lea.vmem [#allocation3], 12
    %v195 = vld [vmem:[%s194] sm:$0xf]
    %v196 = vunpack.c.l.bf16 %v195
    %v197 = vpack.c.bf16 %v187, %v187
    %198 = vmatpush.bf16.msra.mxu0 %v116
    %199 = vmatpush.bf16.msra.mxu0 %v115
    %200 = vmatpush.bf16.msra.mxu0 %v114
    %201 = vmatpush.bf16.msra.mxu0 %v113
    %202 = vmatpush.bf16.msra.mxu0 %v112
    %203 = vmatpush.bf16.msra.mxu0 %v111
    %204 = vmatpush.bf16.msra.mxu0 %v110
    %205 = vmatpush.bf16.msra.mxu0 %v109
    %206 = vmatmul.bf16.gmra.mxu0 %v197
    %v207 = vpop.f32.mrf.mxu0
    %v208 = vadd.f32 0.0, %v207
    %v209 = vpop.f32.mrf.mxu0
    %210 = vdwg.mxu0
    %v211 = vadd.f32 %v196, %v208
    %v212 = vtanh.pop %v211
    %s213 = sadd.s32 %s72, 3
    %v214 = vstv %s213
    %vm215 = vcmp.lt.s32.totalorder %v214, %v55
    %v216 = vsel %vm215, %v212, 0.0
    %s217 = scalar_lea.vmem [#allocation8], 24
    %218 = vst [vmem:[%s217] sm:$0xff] %v216
    %s219 = scalar_lea.vmem [#allocation3], 16
    %v220 = vld [vmem:[%s219] sm:$0xf]
    %v221 = vunpack.c.l.bf16 %v220
    %v222 = vpack.c.bf16 %v212, %v212
    %223 = vmatpush.bf16.msra.mxu0 %v116
    %224 = vmatpush.bf16.msra.mxu0 %v115
    %225 = vmatpush.bf16.msra.mxu0 %v114
    %226 = vmatpush.bf16.msra.mxu0 %v113
    %227 = vmatpush.bf16.msra.mxu0 %v112
    %228 = vmatpush.bf16.msra.mxu0 %v111
    %229 = vmatpush.bf16.msra.mxu0 %v110
    %230 = vmatpush.bf16.msra.mxu0 %v109
    %231 = vmatmul.bf16.gmra.mxu0 %v222
    %v232 = vpop.f32.mrf.mxu0
    %v233 = vadd.f32 0.0, %v232
    %v234 = vpop.f32.mrf.mxu0
    %235 = vdwg.mxu0
    %v236 = vadd.f32 %v221, %v233
    %v237 = vtanh.pop %v236
    %s238 = sadd.s32 %s72, 4
    %v239 = vstv %s238
    %vm240 = vcmp.lt.s32.totalorder %v239, %v55
    %v241 = vsel %vm240, %v237, 0.0
    %s242 = scalar_lea.vmem [#allocation8], 32
    %243 = vst [vmem:[%s242] sm:$0xff] %v241
    %s244 = scalar_lea.vmem [#allocation3], 20
    %v245 = vld [vmem:[%s244] sm:$0xf]
    %v246 = vunpack.c.l.bf16 %v245
    %v247 = vpack.c.bf16 %v237, %v237
    %248 = vmatpush.bf16.msra.mxu0 %v116
    %249 = vmatpush.bf16.msra.mxu0 %v115
    %250 = vmatpush.bf16.msra.mxu0 %v114
    %251 = vmatpush.bf16.msra.mxu0 %v113
    %252 = vmatpush.bf16.msra.mxu0 %v112
    %253 = vmatpush.bf16.msra.mxu0 %v111
    %254 = vmatpush.bf16.msra.mxu0 %v110
    %255 = vmatpush.bf16.msra.mxu0 %v109
    %256 = vmatmul.bf16.gmra.mxu0 %v247
    %v257 = vpop.f32.mrf.mxu0
    %v258 = vadd.f32 0.0, %v257
    %v259 = vpop.f32.mrf.mxu0
    %260 = vdwg.mxu0
    %v261 = vadd.f32 %v246, %v258
    %v262 = vtanh.pop %v261
    %s263 = sadd.s32 %s72, 5
    %v264 = vstv %s263
    %vm265 = vcmp.lt.s32.totalorder %v264, %v55
    %v266 = vsel %vm265, %v262, 0.0
    %s267 = scalar_lea.vmem [#allocation8], 40
    %268 = vst [vmem:[%s267] sm:$0xff] %v266
    %s269 = scalar_lea.vmem [#allocation3], 24
    %v270 = vld [vmem:[%s269] sm:$0xf]
    %v271 = vunpack.c.l.bf16 %v270
    %v272 = vpack.c.bf16 %v262, %v262
    %273 = vmatpush.bf16.msra.mxu0 %v116
    %274 = vmatpush.bf16.msra.mxu0 %v115
    %275 = vmatpush.bf16.msra.mxu0 %v114
    %276 = vmatpush.bf16.msra.mxu0 %v113
    %277 = vmatpush.bf16.msra.mxu0 %v112
    %278 = vmatpush.bf16.msra.mxu0 %v111
    %279 = vmatpush.bf16.msra.mxu0 %v110
    %280 = vmatpush.bf16.msra.mxu0 %v109
    %281 = vmatmul.bf16.gmra.mxu0 %v272
    %v282 = vpop.f32.mrf.mxu0
    %v283 = vadd.f32 0.0, %v282
    %v284 = vpop.f32.mrf.mxu0
    %285 = vdwg.mxu0
    %v286 = vadd.f32 %v271, %v283
    %v287 = vtanh.pop %v286
    %s288 = sadd.s32 %s72, 6
    %v289 = vstv %s288
    %vm290 = vcmp.lt.s32.totalorder %v289, %v55
    %v291 = vsel %vm290, %v287, 0.0
    %s292 = scalar_lea.vmem [#allocation8], 48
    %293 = vst [vmem:[%s292] sm:$0xff] %v291
    %s294 = scalar_lea.vmem [#allocation3], 28
    %v295 = vld [vmem:[%s294] sm:$0xf]
    %v296 = vunpack.c.l.bf16 %v295
    %v297 = vpack.c.bf16 %v287, %v287
    %298 = vmatpush.bf16.msra.mxu0 %v116
    %299 = vmatpush.bf16.msra.mxu0 %v115
    %300 = vmatpush.bf16.msra.mxu0 %v114
    %301 = vmatpush.bf16.msra.mxu0 %v113
    %302 = vmatpush.bf16.msra.mxu0 %v112
    %303 = vmatpush.bf16.msra.mxu0 %v111
    %304 = vmatpush.bf16.msra.mxu0 %v110
    %305 = vmatpush.bf16.msra.mxu0 %v109
    %306 = vmatmul.bf16.gmra.mxu0 %v297
    %v307 = vpop.f32.mrf.mxu0
    %v308 = vadd.f32 0.0, %v307
    %v309 = vpop.f32.mrf.mxu0
    %310 = vdwg.mxu0
    %v311 = vadd.f32 %v296, %v308
    %v312 = vtanh.pop %v311
    %s313 = sadd.s32 %s72, 7
    %v314 = vstv %s313
    %vm315 = vcmp.lt.s32.totalorder %v314, %v55
    %v316 = vsel %vm315, %v312, 0.0
    %s317 = scalar_lea.vmem [#allocation8], 56
    %318 = vst [vmem:[%s317] sm:$0xff] %v316
    %319 = vst [vmem:[#allocation2] sm:$0xff] %v312
    // Predicated region
    $region26: #{tpu_custom_call.1} parent=1 // pred_check
      _
    $region27: #{tpu_custom_call.1} parent=1 // pred_check_branch
      %321 = sbr.rel (0) target = $region29
    $region28: #{tpu_custom_call.1} parent=1 // pred_region
      %323 = vsyncadd [#allocation5], 0
      %s324 = sshll.u32 [#allocation8], 4
      %s325 = int_to_ptr.vmem [resolvable:$true] %s324
      %s326 = sshll.u32 %s3, 4
      %s327 = int_to_ptr.hbm [resolvable:$true] %s326
      %332 = dma.vmem_to_hbm [thread:$0]  %s325, 1024, %s327, [#allocation5], 128, 128, 8
    $region29: #{tpu_custom_call.1} parent=1 // pred_fallthru
      _
    // Predicated region
    $region30: #{tpu_custom_call.1} parent=1 // pred_check
      _
    $region31: #{tpu_custom_call.1} parent=1 // pred_check_branch
      %334 = sbr.rel (0) target = $region33
    $region32: #{tpu_custom_call.1} parent=1 // pred_region
      %336 = dma.done [#allocation5], 1024
    $region33: #{tpu_custom_call.1} parent=1 // pred_fallthru
      _
    %337 = vsyncpa [#allocation4], 1
    %338 = vsyncpa [#allocation7], 1
    %339 = vsyncpa [#allocation5], 1

</llo_original>
